<compile_context>
chip_gen: v7x
topology: tpu7x:2x2x1
jax: 0.10.0
libtpu: 0.0.40
codegen_flags: <defaults>
</compile_context>

<pallas_src>
import jax
import jax.numpy as jnp
import numpy as np
from jax.experimental import pallas as pl
from jax.experimental.pallas import tpu as pltpu


def _round_up(x, m):
    return ((x + m - 1) // m) * m


def _pick_tile(padded_dim, align, max_tile):
    """Largest tile = align*d with d | (padded_dim/align) and tile <= max_tile.

    Guarantees the tile evenly divides the already-aligned dim, so tiling never
    introduces extra padding or a mostly-empty trailing block.
    """
    units = padded_dim // align
    best = 1
    for d in range(min(units, max(max_tile // align, 1)), 0, -1):
        if units % d == 0:
            best = d
            break
    return align * best


# ----------------------------------------------------------------------------
# Kernels: tiled  y = x @ W + b  with f32 accumulation over the K grid axis.
# ----------------------------------------------------------------------------
def _linear_kernel_f32out(x_ref, w_ref, b_ref, o_ref):
    # Output block index is constant over the K axis, so o_ref stays VMEM
    # resident across all K steps and doubles as the f32 accumulator.
    @pl.when(pl.program_id(2) == 0)
    def _():
        o_ref[...] = jnp.broadcast_to(b_ref[...], o_ref.shape)

    o_ref[...] += jnp.dot(x_ref[...], w_ref[...],
                          preferred_element_type=jnp.float32)


def _linear_kernel_acc(x_ref, w_ref, b_ref, o_ref, acc_ref):
    k = pl.program_id(2)

    @pl.when(k == 0)
    def _():
        acc_ref[...] = jnp.broadcast_to(b_ref[...], acc_ref.shape)

    acc_ref[...] += jnp.dot(x_ref[...], w_ref[...],
                            preferred_element_type=jnp.float32)

    @pl.when(k == pl.num_programs(2) - 1)
    def _():
        o_ref[...] = acc_ref[...].astype(o_ref.dtype)


# ----------------------------------------------------------------------------
# One-time parameter prep (transpose + pad + bf16 cast, done at init, not per
# forward call).
#   weight : [target_window, nf]   (PyTorch nn.Linear layout)
#   bias   : [target_window]
# ----------------------------------------------------------------------------
def prepare_params(weight, bias, compute_dtype=jnp.bfloat16):
    tw, nf = weight.shape
    Kp, Np = _round_up(nf, 128), _round_up(tw, 128)
    w = weight.T  # [nf, target_window]
    if (Kp, Np) != w.shape:
        w = jnp.pad(w, ((0, Kp - nf), (0, Np - tw)))
    b = bias.reshape(1, tw).astype(jnp.float32)
    if Np != tw:
        b = jnp.pad(b, ((0, 0), (0, Np - tw)))
    return dict(w=w.astype(compute_dtype), b=b, nf=nf, target_window=tw)


# ----------------------------------------------------------------------------
# Wrapper: Last_Head forward.   x: [..., nf]  ->  [..., target_window]
# ----------------------------------------------------------------------------
def last_head(x, params, *, tm_max=512, tn_max=1024, tk_max=1024):
    w, b = params["w"], params["b"]
    K, N = params["nf"], params["target_window"]
    Kp, Np = w.shape

    *lead, k_in = x.shape
    assert k_in == K, f"expected last dim {K}, got {k_in}"
    M = int(np.prod(lead)) if lead else 1
    Mp = _round_up(M, 8)

    # Fold all leading dims into M, cast matmul operand to bf16, pad only if
    # actually needed.
    x2d = x.reshape(M, K).astype(w.dtype)
    if (Mp, Kp) != (M, K):
        x2d = jnp.pad(x2d, ((0, Mp - M), (0, Kp - K)))

    tm = _pick_tile(Mp, 8, tm_max)
    tn = _pick_tile(Np, 128, tn_max)
    tk = _pick_tile(Kp, 128, tk_max)

    # v7x megacore: ensure the "parallel" part of the grid has >= 2 blocks so
    # the work can be sharded across both TensorCores (no-op on v5e/v6e).
    if (Mp // tm) * (Np // tn) == 1:
        if Np % 256 == 0:
            tn = Np // 2
        elif Mp % 16 == 0:
            tm = Mp // 2

    grid = (Mp // tm, Np // tn, Kp // tk)

    out_dtype = x.dtype
    direct_f32 = jnp.dtype(out_dtype) == jnp.dtype(jnp.float32)
    kernel = _linear_kernel_f32out if direct_f32 else _linear_kernel_acc
    scratch = [] if direct_f32 else [pltpu.VMEM((tm, tn), jnp.float32)]

    out_itemsize = jnp.dtype(out_dtype).itemsize
    cost = pl.CostEstimate(
        flops=2 * Mp * Kp * Np,
        transcendentals=0,
        bytes_accessed=int(Mp * Kp * 2 + Kp * Np * 2 + Np * 4
                           + Mp * Np * out_itemsize),
    )

    out = pl.pallas_call(
        kernel,
        grid=grid,
        in_specs=[
            pl.BlockSpec((tm, tk), lambda i, j, k: (i, k)),   # activations (bf16)
            pl.BlockSpec((tk, tn), lambda i, j, k: (k, j)),   # weight (bf16)
            pl.BlockSpec((1, tn), lambda i, j, k: (0, j)),    # bias (f32)
        ],
        out_specs=pl.BlockSpec((tm, tn), lambda i, j, k: (i, j)),
        out_shape=jax.ShapeDtypeStruct((Mp, Np), out_dtype),
        scratch_shapes=scratch,
        compiler_params=pltpu.CompilerParams(
            dimension_semantics=("parallel", "parallel", "arbitrary"),
            vmem_limit_bytes=48 << 20),
        cost_estimate=cost,
    )(x2d, w, b)

    if (Mp, Np) != (M, N):
        out = out[:M, :N]
    return out.reshape(*lead, N)


# ----------------------------------------------------------------------------
# Deterministic parameter init (matches nn.Linear(nf, target_window)) + ref.
# ----------------------------------------------------------------------------
def init_params(key, nf, target_window):
    kw, kb = jax.random.split(key)
    bound = 1.0 / np.sqrt(nf)
    weight = jax.random.uniform(kw, (target_window, nf), jnp.float32, -bound, bound)
    bias = jax.random.uniform(kb, (target_window,), jnp.float32, -bound, bound)
    return weight, bias


def reference(x, weight, bias):
    return jnp.einsum('...k,nk->...n', x, weight) + bias


if __name__ == "__main__":
    key = jax.random.PRNGKey(0)
    k1, k2, k3, k4 = jax.random.split(key, 4)

    # Case 1: small shapes (bs, n_vars, nf) -> (bs, n_vars, target_window)
    bs, n_vars, nf, target_window = 2, 4, 64, 96
    x1 = jax.random.normal(k1, (bs, n_vars, nf), jnp.float32)
    w1, b1 = init_params(k2, nf, target_window)
    p1 = prepare_params(w1, b1)
    out1 = jax.block_until_ready(last_head(x1, p1))
    ref1 = reference(x1, w1, b1)
    assert out1.shape == (bs, n_vars, target_window)
    np.testing.assert_allclose(np.asarray(out1), np.asarray(ref1),
                               rtol=2e-2, atol=2e-2)

    # Case 2: unaligned shapes exercising padding / megacore-split paths.
    bs2, n_vars2, nf2, tw2 = 3, 5, 160, 200
    x2 = jax.random.normal(k3, (bs2, n_vars2, nf2), jnp.float32)
    w2, b2 = init_params(k4, nf2, tw2)
    p2 = prepare_params(w2, b2)
    out2 = jax.block_until_ready(last_head(x2, p2))
    ref2 = reference(x2, w2, b2)
    assert out2.shape == (bs2, n_vars2, tw2)
    np.testing.assert_allclose(np.asarray(out2), np.asarray(ref2),
                               rtol=2e-2, atol=2e-2)

    print("KERNEL_OK")
</pallas_src>

<mosaic_0001>
module attributes {stable_mosaic.version = 11 : i64} {
  func.func @_linear_kernel_f32out(%arg0: i32, %arg1: i32, %arg2: i32, %arg3: memref<8x128xbf16, #tpu.memory_space<vmem>>, %arg4: memref<128x128xbf16, #tpu.memory_space<vmem>>, %arg5: memref<1x128xf32, #tpu.memory_space<vmem>>, %arg6: memref<8x128xf32, #tpu.memory_space<vmem>>) attributes {dimension_semantics = [#tpu.dimension_semantics<parallel>, #tpu.dimension_semantics<parallel>, #tpu.dimension_semantics<arbitrary>], iteration_bounds = array<i64: 1, 1, 1>, scalar_prefetch = 0 : i64, scratch_operands = 0 : i64, tpu.core_type = #tpu.core_type<tc>, window_params = [{transform_indices = @transform_0, window_bounds = array<i64: 8, 128>}, {transform_indices = @transform_1, window_bounds = array<i64: 128, 128>}, {transform_indices = @transform_2, window_bounds = array<i64: 1, 128>}, {transform_indices = @transform_3, window_bounds = array<i64: 8, 128>}]} {
    %c0_i32 = arith.constant 0 : i32
    %0 = arith.cmpi eq, %arg2, %c0_i32 : i32
    %1 = arith.extui %0 : i1 to i32
    %c0_i32_0 = arith.constant 0 : i32
    %2 = arith.cmpi ne, %1, %c0_i32_0 : i32
    scf.if %2 {
      %c0_8 = arith.constant 0 : index
      %c0_9 = arith.constant 0 : index
      %9 = vector.load %arg5[%c0_8, %c0_9] : memref<1x128xf32, #tpu.memory_space<vmem>>, vector<1x128xf32>
      %10 = vector.shape_cast %9 : vector<1x128xf32> to vector<1x128xf32>
      %11 = vector.broadcast %10 : vector<1x128xf32> to vector<8x128xf32>
      %c0_10 = arith.constant 0 : index
      %c0_11 = arith.constant 0 : index
      %12 = vector.load %arg6[%c0_10, %c0_11] : memref<8x128xf32, #tpu.memory_space<vmem>>, vector<8x128xf32>
      tpu.vector_store %arg6[%c0_10, %c0_11], %11 {strides = array<i32>} : memref<8x128xf32, #tpu.memory_space<vmem>>, vector<8x128xf32>,
    } else {
    }
    %c0 = arith.constant 0 : index
    %c0_1 = arith.constant 0 : index
    %3 = vector.load %arg6[%c0, %c0_1] : memref<8x128xf32, #tpu.memory_space<vmem>>, vector<8x128xf32>
    %c0_2 = arith.constant 0 : index
    %c0_3 = arith.constant 0 : index
    %4 = vector.load %arg3[%c0_2, %c0_3] : memref<8x128xbf16, #tpu.memory_space<vmem>>, vector<8x128xbf16>
    %c0_4 = arith.constant 0 : index
    %c0_5 = arith.constant 0 : index
    %5 = vector.load %arg4[%c0_4, %c0_5] : memref<128x128xbf16, #tpu.memory_space<vmem>>, vector<128x128xbf16>
    %cst = arith.constant dense<0.000000e+00> : vector<8x128xf32>
    %6 = tpu.matmul %4, %5, %cst {dimension_numbers = #tpu.dot_dimension_numbers<[1], [0], [0], [1], [0, 0, 1, 1], [], []>} : vector<8x128xbf16>, vector<128x128xbf16>, vector<8x128xf32> -> vector<8x128xf32>
    %7 = arith.addf %3, %6 : vector<8x128xf32>
    %c0_6 = arith.constant 0 : index
    %c0_7 = arith.constant 0 : index
    %8 = vector.load %arg6[%c0_6, %c0_7] : memref<8x128xf32, #tpu.memory_space<vmem>>, vector<8x128xf32>
    tpu.vector_store %arg6[%c0_6, %c0_7], %7 {strides = array<i32>} : memref<8x128xf32, #tpu.memory_space<vmem>>, vector<8x128xf32>,
    return
  }
  func.func @transform_0(%arg0: i32, %arg1: i32, %arg2: i32) -> (i32, i32) {
    %c0_i32 = arith.constant 0 : i32
    return %arg0, %arg2 : i32, i32
  }
  func.func @transform_1(%arg0: i32, %arg1: i32, %arg2: i32) -> (i32, i32) {
    %c0_i32 = arith.constant 0 : i32
    return %arg2, %arg1 : i32, i32
  }
  func.func @transform_2(%arg0: i32, %arg1: i32, %arg2: i32) -> (i32, i32) {
    %c0_i32 = arith.constant 0 : i32
    %c0_i32_0 = arith.constant 0 : i32
    return %c0_i32, %arg1 : i32, i32
  }
  func.func @transform_3(%arg0: i32, %arg1: i32, %arg2: i32) -> (i32, i32) {
    %c0_i32 = arith.constant 0 : i32
    return %arg0, %arg1 : i32, i32
  }
}

</mosaic_0001>

<llo_original>
// kernel: tpu_custom_call.1
$region0: #{tpu_custom_call.1}
  #allocation0 [shape = 'u32[]', space=smem, size = 0x4, offset = 0x4, fixed_abs, tag = 'smem constant byte address 0x4 - core index']
  #allocation1 [shape = 'u32[144,128]{1,0:T(1,128)}', space=vmem, size = 0x12000, scoped, tag = 'internal scratch']
  %s0 = inlined_call_operand.hbm [shape: bf16[8,128], index: 0, kind: input, shape index: {}]
  %s1 = inlined_call_operand.hbm [shape: bf16[128,128], index: 1, kind: input, shape index: {}]
  %s2 = inlined_call_operand.vmem [shape: f32[1,128], index: 2, kind: input, shape index: {}]
  %s3 = inlined_call_operand.hbm [shape: f32[8,128], index: 3, kind: output, shape index: {}]
  %s4 = sld [smem:[#allocation0]]
  $region34: #{tpu_custom_call.1} parent=0
    _
  %s6 = ssub.s32 1, %s4
  %s7 = scalar_select 0, %s6, %s4
  $region1: #{tpu_custom_call.1} parent=0
    #allocation2 [shape = 'u8[2048]{0}', space=vmem, size = 0x800, scoped, tag = 'input window, operand 0, single buffered']
    #allocation3 [shape = 's32[1]{0}', space=sflag, size = 0x4, scoped, tag = 'scoped memory for tpu_custom_call.1']
    #allocation4 [shape = 's32[1]{0}', space=sflag, size = 0x4, scoped, tag = 'scoped memory for tpu_custom_call.1']
    #allocation5 [shape = 'u8[32768]{0}', space=vmem, size = 0x8000, scoped, tag = 'input window, operand 1, single buffered']
    #allocation6 [shape = 's32[1]{0}', space=sflag, size = 0x4, scoped, tag = 'scoped memory for tpu_custom_call.1']
    #allocation7 [shape = 'u8[4096]{0}', space=vmem, size = 0x1000, scoped, tag = 'output window, operand 0, single buffered']
    %8 = vsyncpa [#allocation3], 0
    %9 = vsyncpa [#allocation6], 0
    %10 = vsyncpa [#allocation4], 0
    // Predicated region
    $region2: #{tpu_custom_call.1} parent=1 // pred_check
      _
    $region3: #{tpu_custom_call.1} parent=1 // pred_check_branch
      %12 = sbr.rel (0) target = $region5
    $region4: #{tpu_custom_call.1} parent=1 // pred_region
      %s14 = ssub.s32 64, 64
      %15 = vsyncadd [#allocation3], %s14
      %s17 = sshll.u32 [#allocation2], 4
      %s18 = int_to_ptr.vmem [resolvable:$true] %s17
      %20 = dma.hbm_to_vmem [thread:$0]  %s0, 64, %s18, [#allocation3]
    $region5: #{tpu_custom_call.1} parent=1 // pred_fallthru
      _
    // Predicated region
    $region6: #{tpu_custom_call.1} parent=1 // pred_check
      _
    $region7: #{tpu_custom_call.1} parent=1 // pred_check_branch
      %22 = sbr.rel (0) target = $region9
    $region8: #{tpu_custom_call.1} parent=1 // pred_region
      %s24 = ssub.s32 1024, 1024
      %25 = vsyncadd [#allocation6], %s24
      %s26 = sshll.u32 [#allocation5], 4
      %s27 = int_to_ptr.vmem [resolvable:$true] %s26
      %32 = dma.hbm_to_vmem [thread:$0]  %s1, 1024, %s27, [#allocation6], 64, 64, 4
    $region9: #{tpu_custom_call.1} parent=1 // pred_fallthru
      _
    // Predicated region
    $region10: #{tpu_custom_call.1} parent=1 // pred_check
      _
    $region11: #{tpu_custom_call.1} parent=1 // pred_check_branch
      %34 = sbr.rel (0) target = $region13
    $region12: #{tpu_custom_call.1} parent=1 // pred_region
      _
    $region13: #{tpu_custom_call.1} parent=1 // pred_fallthru
      _
    // Predicated region
    $region14: #{tpu_custom_call.1} parent=1 // pred_check
      _
    $region15: #{tpu_custom_call.1} parent=1 // pred_check_branch
      %36 = sbr.rel (0) target = $region17
    $region16: #{tpu_custom_call.1} parent=1 // pred_region
      %37 = dma.done [#allocation3], 64
    $region17: #{tpu_custom_call.1} parent=1 // pred_fallthru
      _
    // Predicated region
    $region18: #{tpu_custom_call.1} parent=1 // pred_check
      _
    $region19: #{tpu_custom_call.1} parent=1 // pred_check_branch
      %39 = sbr.rel (0) target = $region21
    $region20: #{tpu_custom_call.1} parent=1 // pred_region
      %40 = dma.done [#allocation6], 1024
    $region21: #{tpu_custom_call.1} parent=1 // pred_fallthru
      _
    %p42 = scmp.eq.s32.totalorder 0, 0
    // Predicated region
    $region22: #{tpu_custom_call.1} parent=1 // pred_check
      %p43 = pneg %p42
    $region23: #{tpu_custom_call.1} parent=1 // pred_check_branch
      %45 = sbr.rel (%p43) target = $region25
    $region24: #{tpu_custom_call.1} parent=1 // pred_region
      %v46 = vld [vmem:[%s2] sm:$0x1]
      %v48 = vlaneseq
      %v49 = vshrl.u32 %v48, 7
      %v50 = vsub.s32 0, %v49
      %v51 = vrot.slane %v46, %v50
      %53 = vst [vmem:[#allocation7] sm:$0xff] %v51
    $region25: #{tpu_custom_call.1} parent=1 // pred_fallthru
      _
    %v54 = vld [vmem:[#allocation7] sm:$0xff]
    %v55 = vld [vmem:[#allocation2] sm:$0xf]
    %v56 = vld [vmem:[#allocation5] sm:$0xf]
    %v57 = vld [vmem:[#allocation5 + $0x4] sm:$0xf]
    %v58 = vld [vmem:[#allocation5 + $0x8] sm:$0xf]
    %v59 = vld [vmem:[#allocation5 + $0xc] sm:$0xf]
    %v60 = vld [vmem:[#allocation5 + $0x10] sm:$0xf]
    %v61 = vld [vmem:[#allocation5 + $0x14] sm:$0xf]
    %v62 = vld [vmem:[#allocation5 + $0x18] sm:$0xf]
    %v63 = vld [vmem:[#allocation5 + $0x1c] sm:$0xf]
    %v64 = vld [vmem:[#allocation5 + $0x20] sm:$0xf]
    %v65 = vld [vmem:[#allocation5 + $0x24] sm:$0xf]
    %v66 = vld [vmem:[#allocation5 + $0x28] sm:$0xf]
    %v67 = vld [vmem:[#allocation5 + $0x2c] sm:$0xf]
    %v68 = vld [vmem:[#allocation5 + $0x30] sm:$0xf]
    %v69 = vld [vmem:[#allocation5 + $0x34] sm:$0xf]
    %v70 = vld [vmem:[#allocation5 + $0x38] sm:$0xf]
    %v71 = vld [vmem:[#allocation5 + $0x3c] sm:$0xf]
    %v88 = vunpack.c.l.b16 %v56
    %v89 = vunpack.c.l.b16 %v57
    %v90 = vunpack.c.l.b16 %v58
    %v91 = vunpack.c.l.b16 %v59
    %v92 = vunpack.c.l.b16 %v60
    %v93 = vunpack.c.l.b16 %v61
    %v94 = vunpack.c.l.b16 %v62
    %v95 = vunpack.c.l.b16 %v63
    %v96 = vunpack.c.l.b16 %v64
    %v97 = vunpack.c.l.b16 %v65
    %v98 = vunpack.c.l.b16 %v66
    %v99 = vunpack.c.l.b16 %v67
    %v100 = vunpack.c.l.b16 %v68
    %v101 = vunpack.c.l.b16 %v69
    %v102 = vunpack.c.l.b16 %v70
    %v103 = vunpack.c.l.b16 %v71
    %v104 = vpack.c.b16 %v89, %v88
    %v105 = vpack.c.b16 %v91, %v90
    %v106 = vpack.c.b16 %v93, %v92
    %v107 = vpack.c.b16 %v95, %v94
    %v108 = vpack.c.b16 %v97, %v96
    %v109 = vpack.c.b16 %v99, %v98
    %v110 = vpack.c.b16 %v101, %v100
    %v111 = vpack.c.b16 %v103, %v102
    %120 = vmatprep.subr.bf16.mxu0 0
    %121 = vmatpush1.bf16.msra.mxu0 %v104
    %122 = vmatprep.subr.bf16.mxu0 0
    %123 = vmatpush1.bf16.msra.mxu0 %v105
    %124 = vmatprep.subr.bf16.mxu0 0
    %125 = vmatpush1.bf16.msra.mxu0 %v106
    %126 = vmatprep.subr.bf16.mxu0 0
    %127 = vmatpush1.bf16.msra.mxu0 %v107
    %128 = vmatprep.subr.bf16.mxu0 0
    %129 = vmatpush1.bf16.msra.mxu0 %v108
    %130 = vmatprep.subr.bf16.mxu0 0
    %131 = vmatpush1.bf16.msra.mxu0 %v109
    %132 = vmatprep.subr.bf16.mxu0 0
    %133 = vmatpush1.bf16.msra.mxu0 %v110
    %134 = vmatprep.subr.bf16.mxu0 0
    %135 = vmatpush1.bf16.msra.mxu0 %v111
    %136 = vmatprep.subr.bf16.mxu0 0
    %137 = vmatpush1.bf16.msra.mxu0 0
    %138 = vmatprep.subr.bf16.mxu0 0
    %139 = vmatpush1.bf16.msra.mxu0 0
    %140 = vmatprep.subr.bf16.mxu0 0
    %141 = vmatpush1.bf16.msra.mxu0 0
    %142 = vmatprep.subr.bf16.mxu0 0
    %143 = vmatpush1.bf16.msra.mxu0 0
    %144 = vmatprep.subr.bf16.mxu0 0
    %145 = vmatpush1.bf16.msra.mxu0 0
    %146 = vmatprep.subr.bf16.mxu0 0
    %147 = vmatpush1.bf16.msra.mxu0 0
    %148 = vmatprep.subr.bf16.mxu0 0
    %149 = vmatpush1.bf16.msra.mxu0 0
    %150 = vmatprep.subr.bf16.mxu0 0
    %151 = vmatpush1.bf16.msra.mxu0 0
    %152 = vmatprep.mubr.bf16.mxu0 0
    %153 = vmatmul.mubr.bf16.gmra.mrb[0].mxu0 %v55
    %v154 = vpop.f32.mrb[0].mxu0
    %v155 = vadd.f32 0.0, %v154
    %v156 = vpop.f32.mrb[0].mxu0
    %v157 = vpop.f32.mrb[0].mxu0
    %v158 = vpop.f32.mrb[0].mxu0
    %159 = vdwg.mxu0
    %v160 = vadd.f32 %v54, %v155
    %161 = vst [vmem:[#allocation7] sm:$0xff] %v160
    // Predicated region
    $region26: #{tpu_custom_call.1} parent=1 // pred_check
      _
    $region27: #{tpu_custom_call.1} parent=1 // pred_check_branch
      %163 = sbr.rel (0) target = $region29
    $region28: #{tpu_custom_call.1} parent=1 // pred_region
      %s165 = ssub.s32 128, 128
      %166 = vsyncadd [#allocation4], %s165
      %s168 = sshll.u32 [#allocation7], 4
      %s169 = int_to_ptr.vmem [resolvable:$true] %s168
      %171 = dma.vmem_to_hbm [thread:$0]  %s169, 128, %s3, [#allocation4]
    $region29: #{tpu_custom_call.1} parent=1 // pred_fallthru
      _
    // Predicated region
    $region30: #{tpu_custom_call.1} parent=1 // pred_check
      _
    $region31: #{tpu_custom_call.1} parent=1 // pred_check_branch
      %173 = sbr.rel (0) target = $region33
    $region32: #{tpu_custom_call.1} parent=1 // pred_region
      %174 = dma.done [#allocation4], 128
    $region33: #{tpu_custom_call.1} parent=1 // pred_fallthru
      _
    %175 = vsyncpa [#allocation3], 1
    %176 = vsyncpa [#allocation6], 1
    %177 = vsyncpa [#allocation4], 1

</llo_original>
